<compile_context>
chip_gen: v7x
topology: tpu7x:2x2x1
jax: 0.10.0
libtpu: 0.0.40
codegen_flags: <defaults>
</compile_context>

<pallas_src>
import functools

import jax
import jax.numpy as jnp
import numpy as np
from jax.experimental import pallas as pl
from jax.experimental.pallas import tpu as pltpu


# ----------------------------------------------------------------------------
# Pallas kernels
# ----------------------------------------------------------------------------
def linear_kernel(x_ref, w_ref, b_ref, o_ref):
    # x: (M, Cin), w: (Cin, Cout), b: (1, Cout)
    o_ref[...] = (
        jnp.dot(x_ref[...], w_ref[...], preferred_element_type=jnp.float32)
        + b_ref[...]
    )


def linear(x2d, w, b):
    # TODO(synk): at production scale, fuse the qkv projection + window gather into
    # the attention pallas_call via scalar-prefetched window indices (removes a
    # kernel launch and one HBM round trip); negligible at this toy size.
    M, _ = x2d.shape
    Cout = w.shape[1]
    return pl.pallas_call(
        linear_kernel,
        out_shape=jax.ShapeDtypeStruct((M, Cout), jnp.float32),
    )(x2d, w, b.reshape(1, Cout))


def window_attn_kernel(q_ref, k_ref, v_ref, bias_ref, wproj_ref, bproj_ref,
                       o_ref, *, bw, num_heads, window_area, head_dim, dim):
    # q_ref: (bw, nh, wa, hd) bf16      k_ref/v_ref: (bw, nh, Npad, hd) bf16
    # bias_ref: (nh, wa, Npad) f32      wproj_ref: (nh, hd, C) f32
    # bproj_ref: (1, C) f32             o_ref: (bw*wa, C) f32
    nh, wa, hd, C = num_heads, window_area, head_dim, dim
    npad = k_ref.shape[2]
    g = bw * nh

    # bf16 matmul operands, f32 MXU accumulation; qk scale already folded into Wq.
    q = q_ref[...].reshape(g, wa, hd)
    k = k_ref[...].reshape(g, npad, hd)
    v = v_ref[...].reshape(g, npad, hd)

    # attention logits + relative-position bias (padded key columns carry -1e9 bias)
    s = jnp.einsum("gqd,gkd->gqk", q, k, preferred_element_type=jnp.float32)
    s = (s.reshape(bw, nh, wa, npad) + bias_ref[...][None]).reshape(g, wa, npad)

    # f32 softmax over keys; divide goes to the EUP via approximate reciprocal.
    m = jnp.max(s, axis=-1, keepdims=True)
    e = jnp.exp(s - m)
    denom = jnp.sum(e, axis=-1, keepdims=True)
    p = (e * pl.reciprocal(denom, approx=True)).astype(v.dtype)

    # weighted sum of values
    out = jnp.einsum("gqk,gkd->gqd", p, v, preferred_element_type=jnp.float32)
    out = out.reshape(bw, nh, wa, hd)                        # f32

    # Head-merge + output projection without any transpose/relayout:
    #   y[b*wa + q, :] = sum_h out[b, h, q, :] @ W_proj[h*hd:(h+1)*hd, :]
    acc = jnp.dot(out[:, 0].reshape(bw * wa, hd), wproj_ref[0],
                  preferred_element_type=jnp.float32)
    for h in range(1, nh):                                   # static unroll, nh tiny
        acc = acc + jnp.dot(out[:, h].reshape(bw * wa, hd), wproj_ref[h],
                            preferred_element_type=jnp.float32)
    o_ref[...] = acc + bproj_ref[...]


def window_attention_core(q_windows, k_all, v_all, bias, w_proj, b_proj):
    nW, nh, wa, hd = q_windows.shape
    npad = k_all.shape[2]
    C = nh * hd
    # Batch windows per grid step; keep >=2 "parallel" steps so v7x's two
    # TensorCores both get work (v5e/v6e are single-TC, this costs nothing there).
    n_steps = 2 if (nW % 2 == 0 and nW >= 2) else 1
    bw = nW // n_steps

    kern = functools.partial(
        window_attn_kernel,
        bw=bw, num_heads=nh, window_area=wa, head_dim=hd, dim=C,
    )
    out2d = pl.pallas_call(
        kern,
        out_shape=jax.ShapeDtypeStruct((nW * wa, C), jnp.float32),
        grid_spec=pltpu.PrefetchScalarGridSpec(
            num_scalar_prefetch=0,
            grid=(n_steps,),
            in_specs=[
                pl.BlockSpec((bw, nh, wa, hd), lambda i: (i, 0, 0, 0)),
                pl.BlockSpec((bw, nh, npad, hd), lambda i: (i, 0, 0, 0)),
                pl.BlockSpec((bw, nh, npad, hd), lambda i: (i, 0, 0, 0)),
                pl.BlockSpec((nh, wa, npad), lambda i: (0, 0, 0)),
                pl.BlockSpec((nh, hd, C), lambda i: (0, 0, 0)),
                pl.BlockSpec((1, C), lambda i: (0, 0)),
            ],
            out_specs=pl.BlockSpec((bw * wa, C), lambda i: (i, 0)),
        ),
        compiler_params=pltpu.CompilerParams(
            dimension_semantics=("parallel",)),
    )(q_windows, k_all, v_all, bias, w_proj.reshape(nh, hd, C),
      b_proj.reshape(1, C))
    return out2d.reshape(nW, wa, C)


# ----------------------------------------------------------------------------
# Plain-JAX glue (window partition, rolls, bias tables)
# ----------------------------------------------------------------------------
def window_partition(x, ws):
    B, H, W, C = x.shape
    x = x.reshape(B, H // ws, ws, W // ws, ws, C)
    return x.transpose(0, 1, 3, 2, 4, 5).reshape(-1, ws, ws, C)


def get_relative_position_index(ws):
    coords = np.stack(np.meshgrid(np.arange(ws), np.arange(ws), indexing="ij"))
    cf = coords.reshape(2, -1)
    rel = cf[:, :, None] - cf[:, None, :]
    rel = rel.transpose(1, 2, 0).copy()
    rel[:, :, 0] += ws - 1
    rel[:, :, 1] += ws - 1
    rel[:, :, 0] *= 2 * ws - 1
    return rel.sum(-1)  # (wa, wa)


def valid_ind_rolled_np(ws, e):
    mask_tl = np.ones((ws, ws)); mask_tl[:-e, :-e] = 0
    mask_tr = np.ones((ws, ws)); mask_tr[:-e, e:] = 0
    mask_bl = np.ones((ws, ws)); mask_bl[e:, :-e] = 0
    mask_br = np.ones((ws, ws)); mask_br[e:, e:] = 0
    m = np.stack([mask_tl, mask_tr, mask_bl, mask_br], 0).reshape(-1)
    return np.nonzero(m)[0]


class WindowAttentionPallas:
    def __init__(self, dim, expand_size, window_size, num_heads, key):
        self.dim = dim
        self.expand_size = expand_size
        self.window_size = window_size
        self.num_heads = num_heads
        self.head_dim = dim // num_heads
        self.scale = self.head_dim ** (-0.5)
        ws = window_size
        wa = ws * ws
        self.window_size_of_key = 4 * wa - 4 * (ws - expand_size) ** 2

        k1, k2, k3, k4, k5, k6 = jax.random.split(key, 6)
        self.w_qkv = jax.random.normal(k1, (dim, 3 * dim), jnp.float32) * 0.05
        self.b_qkv = jax.random.normal(k2, (3 * dim,), jnp.float32) * 0.05
        self.w_proj = jax.random.normal(k3, (dim, dim), jnp.float32) * 0.05
        self.b_proj = jax.random.normal(k4, (dim,), jnp.float32) * 0.05
        # trunc_normal(std=0.02) approximated by normal * 0.02 (synthetic weights)
        self.rel_pos_bias_table = (
            jax.random.normal(k5, ((2 * ws - 1) * (2 * ws - 1), num_heads),
                              jnp.float32) * 0.02)
        self.rel_pos_bias_to_neighbors = (
            jax.random.normal(k6, (1, num_heads, wa, self.window_size_of_key),
                              jnp.float32) * 0.02)

        # Fold the qk scale into the Q columns of the qkv projection (q * scale
        # after the linear == scaling the Q weight/bias) -> no mul in the kernel.
        scale_vec = jnp.concatenate(
            [jnp.full((dim,), self.scale, jnp.float32),
             jnp.ones((2 * dim,), jnp.float32)])
        self.w_qkv_s = self.w_qkv * scale_vec[None, :]
        self.b_qkv_s = self.b_qkv * scale_vec

        self.rel_pos_index = jnp.asarray(get_relative_position_index(ws))
        self.valid_ind_rolled = jnp.asarray(valid_ind_rolled_np(ws, expand_size))

    # ------------------------------------------------------------------
    def _prepare(self, x):
        """Glue: qkv projection (Pallas linear), windowing, rolls, bias, padding."""
        B, H, W, C = x.shape
        ws, nh, hd = self.window_size, self.num_heads, self.head_dim
        wa = ws * ws
        e = self.expand_size

        qkv = linear(x.reshape(-1, C), self.w_qkv_s, self.b_qkv_s)
        qkv = qkv.reshape(B, H, W, 3, C)
        q, k, v = qkv[..., 0, :], qkv[..., 1, :], qkv[..., 2, :]

        def to_windows(t):  # (B,H,W,C) -> (nW, nh, wa, hd)
            return window_partition(t, ws).reshape(-1, wa, nh, hd).transpose(0, 2, 1, 3)

        q_win = to_windows(q)
        k_win = to_windows(k)
        v_win = to_windows(v)

        def rolled(t, sh, sw):  # -> (nW, wa, nh, hd)
            r = jnp.roll(t, shift=(sh, sw), axis=(1, 2))
            return window_partition(r, ws).reshape(-1, wa, nh, hd)

        def build_rolled(t):
            parts = [rolled(t, -e, -e), rolled(t, -e, e),
                     rolled(t, e, -e), rolled(t, e, e)]
            cat = jnp.concatenate(parts, axis=1).transpose(0, 2, 1, 3)  # (nW,nh,4wa,hd)
            return cat[:, :, self.valid_ind_rolled]                      # (nW,nh,28,hd)

        k_all = jnp.concatenate([k_win, build_rolled(k)], axis=2)
        v_all = jnp.concatenate([v_win, build_rolled(v)], axis=2)

        # combined relative-position bias (nh, wa, N)
        rpb = self.rel_pos_bias_table[self.rel_pos_index.reshape(-1)]
        rpb = rpb.reshape(wa, wa, nh).transpose(2, 0, 1)                 # (nh,wa,wa)
        bias = jnp.concatenate([rpb, self.rel_pos_bias_to_neighbors[0]], axis=-1)

        # Pad key length N (44) up to a sublane multiple (48); pad keys/values are
        # zero and their bias is -1e9 so they vanish in the softmax.
        N = k_all.shape[2]
        npad = ((N + 7) // 8) * 8
        if npad != N:
            pad = npad - N
            k_all = jnp.pad(k_all, ((0, 0), (0, 0), (0, pad), (0, 0)))
            v_all = jnp.pad(v_all, ((0, 0), (0, 0), (0, pad), (0, 0)))
            bias = jnp.pad(bias, ((0, 0), (0, 0), (0, pad)), constant_values=-1e9)

        # bf16 matmul operands (f32 accumulation in-kernel); softmax stays f32.
        q_win = q_win.astype(jnp.bfloat16)
        k_all = k_all.astype(jnp.bfloat16)
        v_all = v_all.astype(jnp.bfloat16)
        return q_win, k_all, v_all, bias

    def __call__(self, x_all, mask_all=None):
        # TODO(synk): pooled-window branch (pool_method != 'none', focal_level > 1)
        # and the mask_all[0] attention mask are not exercised in this config.
        x = x_all[0]
        q_win, k_all, v_all, bias = self._prepare(x)
        return window_attention_core(q_win, k_all, v_all, bias,
                                     self.w_proj, self.b_proj)

    # pure-JAX reference of the same forward pass (for verification)
    def reference(self, x_all):
        x = x_all[0]
        q_win, k_all, v_all, bias = self._prepare(x)
        nW, nh, wa, hd = q_win.shape
        C = nh * hd
        attn = jnp.einsum("whqd,whkd->whqk", q_win, k_all,
                          preferred_element_type=jnp.float32) + bias[None]
        attn = jax.nn.softmax(attn, axis=-1)
        out = jnp.einsum("whqk,whkd->whqd", attn.astype(v_all.dtype), v_all,
                         preferred_element_type=jnp.float32)
        out = out.transpose(0, 2, 1, 3).reshape(nW, wa, C)
        return out @ self.w_proj + self.b_proj


# ----------------------------------------------------------------------------
if __name__ == "__main__":
    key = jax.random.PRNGKey(0)
    k_param, k_x = jax.random.split(key)

    dim, num_heads, window_size, expand_size = 16, 2, 4, 1
    B, H, W = 2, 8, 8   # -> 2 * (8/4) * (8/4) = 8 windows of 16 tokens each

    module = WindowAttentionPallas(dim, expand_size, window_size, num_heads, k_param)
    x = jax.random.normal(k_x, (B, H, W, dim), jnp.float32)

    out = module([x], mask_all=[None])
    out = jax.block_until_ready(out)

    ref = module.reference([x])
    assert out.shape == (B * (H // window_size) * (W // window_size),
                         window_size * window_size, dim)
    np.testing.assert_allclose(np.asarray(out), np.asarray(ref),
                               rtol=2e-3, atol=2e-3)
    print("KERNEL_OK")
</pallas_src>

<mosaic_0001>
module attributes {stable_mosaic.version = 11 : i64} {
  func.func @linear_kernel(%arg0: memref<128x16xf32, #tpu.memory_space<vmem>>, %arg1: memref<16x48xf32, #tpu.memory_space<vmem>>, %arg2: memref<1x48xf32, #tpu.memory_space<vmem>>, %arg3: memref<128x48xf32, #tpu.memory_space<vmem>>) attributes {dimension_semantics = [], scalar_prefetch = 0 : i64, scratch_operands = 0 : i64, tpu.core_type = #tpu.core_type<tc>} {
    %c0 = arith.constant 0 : index
    %c0_0 = arith.constant 0 : index
    %0 = vector.load %arg0[%c0, %c0_0] : memref<128x16xf32, #tpu.memory_space<vmem>>, vector<128x16xf32>
    %c0_1 = arith.constant 0 : index
    %c0_2 = arith.constant 0 : index
    %1 = vector.load %arg1[%c0_1, %c0_2] : memref<16x48xf32, #tpu.memory_space<vmem>>, vector<16x48xf32>
    %cst = arith.constant dense<0.000000e+00> : vector<128x48xf32>
    %2 = tpu.matmul %0, %1, %cst {dimension_numbers = #tpu.dot_dimension_numbers<[1], [0], [0], [1], [0, 0, 1, 1], [], []>} : vector<128x16xf32>, vector<16x48xf32>, vector<128x48xf32> -> vector<128x48xf32>
    %c0_3 = arith.constant 0 : index
    %c0_4 = arith.constant 0 : index
    %3 = vector.load %arg2[%c0_3, %c0_4] : memref<1x48xf32, #tpu.memory_space<vmem>>, vector<1x48xf32>
    %4 = vector.broadcast %3 : vector<1x48xf32> to vector<128x48xf32>
    %5 = arith.addf %2, %4 : vector<128x48xf32>
    %c0_5 = arith.constant 0 : index
    %c0_6 = arith.constant 0 : index
    %6 = vector.load %arg3[%c0_5, %c0_6] : memref<128x48xf32, #tpu.memory_space<vmem>>, vector<128x48xf32>
    tpu.vector_store %arg3[%c0_5, %c0_6], %5 {strides = array<i32>} : memref<128x48xf32, #tpu.memory_space<vmem>>, vector<128x48xf32>,
    return
  }
}

</mosaic_0001>

<llo_original>
// kernel: tpu_custom_call.1
$region0: #{tpu_custom_call.1}
  #allocation0 [shape = 'u32[]', space=smem, size = 0x4, offset = 0x4, fixed_abs, tag = 'smem constant byte address 0x4 - core index']
  #allocation1 [shape = 'u32[144,128]{1,0:T(1,128)}', space=vmem, size = 0x12000, scoped, tag = 'internal scratch']
  %s0 = inlined_call_operand.vmem [shape: f32[128,16], index: 0, kind: input, shape index: {}]
  %s1 = inlined_call_operand.vmem [shape: f32[16,48], index: 1, kind: input, shape index: {}]
  %s2 = inlined_call_operand.vmem [shape: f32[1,48], index: 2, kind: input, shape index: {}]
  %s3 = inlined_call_operand.vmem [shape: f32[128,48], index: 3, kind: output, shape index: {}]
  %s4 = sld [smem:[#allocation0]]
  $region22: #{tpu_custom_call.1} parent=0
    _
  %s6 = ssub.s32 1, %s4
  %s7 = scalar_select 0, %s6, %s4
  // Predicated region
  $region2: #{tpu_custom_call.1} parent=0 // pred_check
    _
  $region3: #{tpu_custom_call.1} parent=0 // pred_check_branch
    %9 = sbr.rel (0) target = $region5
  $region4: #{tpu_custom_call.1} parent=0 // pred_region
    _
  $region5: #{tpu_custom_call.1} parent=0 // pred_fallthru
    _
  // Predicated region
  $region6: #{tpu_custom_call.1} parent=0 // pred_check
    _
  $region7: #{tpu_custom_call.1} parent=0 // pred_check_branch
    %11 = sbr.rel (0) target = $region9
  $region8: #{tpu_custom_call.1} parent=0 // pred_region
    _
  $region9: #{tpu_custom_call.1} parent=0 // pred_fallthru
    _
  // Predicated region
  $region10: #{tpu_custom_call.1} parent=0 // pred_check
    _
  $region11: #{tpu_custom_call.1} parent=0 // pred_check_branch
    %13 = sbr.rel (0) target = $region13
  $region12: #{tpu_custom_call.1} parent=0 // pred_region
    _
  $region13: #{tpu_custom_call.1} parent=0 // pred_fallthru
    _
  %v14 = vld [vmem:[%s0] sm:$0xff]
  %v15 = vld [vmem:[%s0 + $0x8] sm:$0xff]
  %v16 = vld [vmem:[%s0 + $0x10] sm:$0xff]
  %v17 = vld [vmem:[%s0 + $0x18] sm:$0xff]
  %v18 = vld [vmem:[%s0 + $0x20] sm:$0xff]
  %v19 = vld [vmem:[%s0 + $0x28] sm:$0xff]
  %v20 = vld [vmem:[%s0 + $0x30] sm:$0xff]
  %v21 = vld [vmem:[%s0 + $0x38] sm:$0xff]
  %v22 = vld [vmem:[%s0 + $0x40] sm:$0xff]
  %v23 = vld [vmem:[%s0 + $0x48] sm:$0xff]
  %v24 = vld [vmem:[%s0 + $0x50] sm:$0xff]
  %v25 = vld [vmem:[%s0 + $0x58] sm:$0xff]
  %v26 = vld [vmem:[%s0 + $0x60] sm:$0xff]
  %v27 = vld [vmem:[%s0 + $0x68] sm:$0xff]
  %v28 = vld [vmem:[%s0 + $0x70] sm:$0xff]
  %v29 = vld [vmem:[%s0 + $0x78] sm:$0xff]
  %v30 = vld [vmem:[%s1] sm:$0xff]
  %v31 = vld [vmem:[%s1 + $0x8] sm:$0xff]
  %v32 = vld [vmem:[%s2] sm:$0x1]
  %v34 = vlaneseq
  %v35 = vshrl.u32 %v34, 7
  %v36 = vsub.s32 0, %v35
  %v37 = vrot.slane %v32, %v36
  %vm39 = vcmask 130048
  %v41 = vsel %vm39, %v14, 0
  %v44 = vsel %vm39, %v15, 0
  %v47 = vsel %vm39, %v16, 0
  %v50 = vsel %vm39, %v17, 0
  %v53 = vsel %vm39, %v18, 0
  %v56 = vsel %vm39, %v19, 0
  %v59 = vsel %vm39, %v20, 0
  %v62 = vsel %vm39, %v21, 0
  %v65 = vsel %vm39, %v22, 0
  %v68 = vsel %vm39, %v23, 0
  %v71 = vsel %vm39, %v24, 0
  %v74 = vsel %vm39, %v25, 0
  %v77 = vsel %vm39, %v26, 0
  %v80 = vsel %vm39, %v27, 0
  %v83 = vsel %vm39, %v28, 0
  %v86 = vsel %vm39, %v29, 0
  %88 = vmatprep.subr.mxu0 0.0
  %89 = vmatpush1.msra.mxu0 %v30
  %90 = vmatprep.subr.mxu0 0.0
  %91 = vmatpush1.msra.mxu0 %v31
  %92 = vmatprep.subr.mxu0 0.0
  %93 = vmatpush1.msra.mxu0 0.0
  %94 = vmatprep.subr.mxu0 0.0
  %95 = vmatpush1.msra.mxu0 0.0
  %96 = vmatprep.subr.mxu0 0.0
  %97 = vmatpush1.msra.mxu0 0.0
  %98 = vmatprep.subr.mxu0 0.0
  %99 = vmatpush1.msra.mxu0 0.0
  %100 = vmatprep.subr.mxu0 0.0
  %101 = vmatpush1.msra.mxu0 0.0
  %102 = vmatprep.subr.mxu0 0.0
  %103 = vmatpush1.msra.mxu0 0.0
  %104 = vmatprep.subr.mxu0 0.0
  %105 = vmatpush1.msra.mxu0 0.0
  %106 = vmatprep.subr.mxu0 0.0
  %107 = vmatpush1.msra.mxu0 0.0
  %108 = vmatprep.subr.mxu0 0.0
  %109 = vmatpush1.msra.mxu0 0.0
  %110 = vmatprep.subr.mxu0 0.0
  %111 = vmatpush1.msra.mxu0 0.0
  %112 = vmatprep.subr.mxu0 0.0
  %113 = vmatpush1.msra.mxu0 0.0
  %114 = vmatprep.subr.mxu0 0.0
  %115 = vmatpush1.msra.mxu0 0.0
  %116 = vmatprep.subr.mxu0 0.0
  %117 = vmatpush1.msra.mxu0 0.0
  %118 = vmatprep.subr.mxu0 0.0
  %119 = vmatpush1.msra.mxu0 0.0
  %120 = vmatprep.subr.mxu0 0.0
  %121 = vmatpush1.msra.mxu0 0.0
  %122 = vmatprep.subr.mxu0 0.0
  %123 = vmatpush1.msra.mxu0 0.0
  %124 = vmatprep.subr.mxu0 0.0
  %125 = vmatpush1.msra.mxu0 0.0
  %126 = vmatprep.subr.mxu0 0.0
  %127 = vmatpush1.msra.mxu0 0.0
  %128 = vmatprep.subr.mxu0 0.0
  %129 = vmatpush1.msra.mxu0 0.0
  %130 = vmatprep.subr.mxu0 0.0
  %131 = vmatpush1.msra.mxu0 0.0
  %132 = vmatprep.subr.mxu0 0.0
  %133 = vmatpush1.msra.mxu0 0.0
  %134 = vmatprep.subr.mxu0 0.0
  %135 = vmatpush1.msra.mxu0 0.0
  %136 = vmatprep.subr.mxu0 0.0
  %137 = vmatpush1.msra.mxu0 0.0
  %138 = vmatprep.subr.mxu0 0.0
  %139 = vmatpush1.msra.mxu0 0.0
  %140 = vmatprep.subr.mxu0 0.0
  %141 = vmatpush1.msra.mxu0 0.0
  %142 = vmatprep.subr.mxu0 0.0
  %143 = vmatpush1.msra.mxu0 0.0
  %144 = vmatprep.subr.mxu0 0.0
  %145 = vmatpush1.msra.mxu0 0.0
  %146 = vmatprep.subr.mxu0 0.0
  %147 = vmatpush1.msra.mxu0 0.0
  %148 = vmatprep.subr.mxu0 0.0
  %149 = vmatpush1.msra.mxu0 0.0
  %150 = vmatprep.subr.mxu0 0.0
  %151 = vmatpush1.msra.mxu0 0.0
  %152 = vmatprep.mubr.f32.mxu0 0.0
  %153 = vmatmul.mubr.f32.gmra.mrb[0].mxu0 %v41
  %v154 = vpop.f32.mrb[0].mxu0
  %v155 = vadd.f32 %v37, %v154
  %v156 = vpop.f32.mrb[0].mxu0
  %157 = vmatprep.mubr.f32.mxu0 0.0
  %158 = vmatmul.mubr.f32.gmra.mrb[0].mxu0 %v44
  %v159 = vpop.f32.mrb[0].mxu0
  %v160 = vadd.f32 %v37, %v159
  %v161 = vpop.f32.mrb[0].mxu0
  %162 = vmatprep.mubr.f32.mxu0 0.0
  %163 = vmatmul.mubr.f32.gmra.mrb[0].mxu0 %v47
  %v164 = vpop.f32.mrb[0].mxu0
  %v165 = vadd.f32 %v37, %v164
  %v166 = vpop.f32.mrb[0].mxu0
  %167 = vmatprep.mubr.f32.mxu0 0.0
  %168 = vmatmul.mubr.f32.gmra.mrb[0].mxu0 %v50
  %v169 = vpop.f32.mrb[0].mxu0
  %v170 = vadd.f32 %v37, %v169
  %v171 = vpop.f32.mrb[0].mxu0
  %172 = vmatprep.mubr.f32.mxu0 0.0
  %173 = vmatmul.mubr.f32.gmra.mrb[0].mxu0 %v53
  %v174 = vpop.f32.mrb[0].mxu0
  %v175 = vadd.f32 %v37, %v174
  %v176 = vpop.f32.mrb[0].mxu0
  %177 = vmatprep.mubr.f32.mxu0 0.0
  %178 = vmatmul.mubr.f32.gmra.mrb[0].mxu0 %v56
  %v179 = vpop.f32.mrb[0].mxu0
  %v180 = vadd.f32 %v37, %v179
  %v181 = vpop.f32.mrb[0].mxu0
  %182 = vmatprep.mubr.f32.mxu0 0.0
  %183 = vmatmul.mubr.f32.gmra.mrb[0].mxu0 %v59
  %v184 = vpop.f32.mrb[0].mxu0
  %v185 = vadd.f32 %v37, %v184
  %v186 = vpop.f32.mrb[0].mxu0
  %187 = vmatprep.mubr.f32.mxu0 0.0
  %188 = vmatmul.mubr.f32.gmra.mrb[0].mxu0 %v62
  %v189 = vpop.f32.mrb[0].mxu0
  %v190 = vadd.f32 %v37, %v189
  %v191 = vpop.f32.mrb[0].mxu0
  %192 = vmatprep.mubr.f32.mxu0 0.0
  %193 = vmatmul.mubr.f32.gmra.mrb[0].mxu0 %v65
  %v194 = vpop.f32.mrb[0].mxu0
  %v195 = vadd.f32 %v37, %v194
  %v196 = vpop.f32.mrb[0].mxu0
  %197 = vmatprep.mubr.f32.mxu0 0.0
  %198 = vmatmul.mubr.f32.gmra.mrb[0].mxu0 %v68
  %v199 = vpop.f32.mrb[0].mxu0
  %v200 = vadd.f32 %v37, %v199
  %v201 = vpop.f32.mrb[0].mxu0
  %202 = vmatprep.mubr.f32.mxu0 0.0
  %203 = vmatmul.mubr.f32.gmra.mrb[0].mxu0 %v71
  %v204 = vpop.f32.mrb[0].mxu0
  %v205 = vadd.f32 %v37, %v204
  %v206 = vpop.f32.mrb[0].mxu0
  %207 = vmatprep.mubr.f32.mxu0 0.0
  %208 = vmatmul.mubr.f32.gmra.mrb[0].mxu0 %v74
  %v209 = vpop.f32.mrb[0].mxu0
  %v210 = vadd.f32 %v37, %v209
  %v211 = vpop.f32.mrb[0].mxu0
  %212 = vmatprep.mubr.f32.mxu0 0.0
  %213 = vmatmul.mubr.f32.gmra.mrb[0].mxu0 %v77
  %v214 = vpop.f32.mrb[0].mxu0
  %v215 = vadd.f32 %v37, %v214
  %v216 = vpop.f32.mrb[0].mxu0
  %217 = vmatprep.mubr.f32.mxu0 0.0
  %218 = vmatmul.mubr.f32.gmra.mrb[0].mxu0 %v80
  %v219 = vpop.f32.mrb[0].mxu0
  %v220 = vadd.f32 %v37, %v219
  %v221 = vpop.f32.mrb[0].mxu0
  %222 = vmatprep.mubr.f32.mxu0 0.0
  %223 = vmatmul.mubr.f32.gmra.mrb[0].mxu0 %v83
  %v224 = vpop.f32.mrb[0].mxu0
  %v225 = vadd.f32 %v37, %v224
  %v226 = vpop.f32.mrb[0].mxu0
  %227 = vmatprep.mubr.f32.mxu0 0.0
  %228 = vmatmul.mubr.f32.gmra.mrb[0].mxu0 %v86
  %v229 = vpop.f32.mrb[0].mxu0
  %v230 = vadd.f32 %v37, %v229
  %v231 = vpop.f32.mrb[0].mxu0
  %232 = vdwg.mxu0
  %vm233 = vcmask 392192
  %234 = vst.msk [vmem:[%s3] sm:$0xff] %vm233, %v155
  %235 = vst.msk [vmem:[%s3 + $0x8] sm:$0xff] %vm233, %v160
  %236 = vst.msk [vmem:[%s3 + $0x10] sm:$0xff] %vm233, %v165
  %237 = vst.msk [vmem:[%s3 + $0x18] sm:$0xff] %vm233, %v170
  %238 = vst.msk [vmem:[%s3 + $0x20] sm:$0xff] %vm233, %v175
  %239 = vst.msk [vmem:[%s3 + $0x28] sm:$0xff] %vm233, %v180
  %240 = vst.msk [vmem:[%s3 + $0x30] sm:$0xff] %vm233, %v185
  %241 = vst.msk [vmem:[%s3 + $0x38] sm:$0xff] %vm233, %v190
  %242 = vst.msk [vmem:[%s3 + $0x40] sm:$0xff] %vm233, %v195
  %243 = vst.msk [vmem:[%s3 + $0x48] sm:$0xff] %vm233, %v200
  %244 = vst.msk [vmem:[%s3 + $0x50] sm:$0xff] %vm233, %v205
  %245 = vst.msk [vmem:[%s3 + $0x58] sm:$0xff] %vm233, %v210
  %246 = vst.msk [vmem:[%s3 + $0x60] sm:$0xff] %vm233, %v215
  %247 = vst.msk [vmem:[%s3 + $0x68] sm:$0xff] %vm233, %v220
  %248 = vst.msk [vmem:[%s3 + $0x70] sm:$0xff] %vm233, %v225
  %249 = vst.msk [vmem:[%s3 + $0x78] sm:$0xff] %vm233, %v230
  // Predicated region
  $region14: #{tpu_custom_call.1} parent=0 // pred_check
    _
  $region15: #{tpu_custom_call.1} parent=0 // pred_check_branch
    %251 = sbr.rel (0) target = $region17
  $region16: #{tpu_custom_call.1} parent=0 // pred_region
    _
  $region17: #{tpu_custom_call.1} parent=0 // pred_fallthru
    _
  // Predicated region
  $region18: #{tpu_custom_call.1} parent=0 // pred_check
    _
  $region19: #{tpu_custom_call.1} parent=0 // pred_check_branch
    %253 = sbr.rel (0) target = $region21
  $region20: #{tpu_custom_call.1} parent=0 // pred_region
    _
  $region21: #{tpu_custom_call.1} parent=0 // pred_fallthru
    _

</llo_original>
